<compile_context>
chip_gen: v6e
topology: v6e:2x2x1
jax: 0.10.0
libtpu: 0.0.40
codegen_flags: <defaults>
</compile_context>

<pallas_src>
import jax
import jax.numpy as jnp
import numpy as np
from jax.experimental import pallas as pl
from jax.experimental.pallas import tpu as pltpu


def _round_up(x, m):
    return (x + m - 1) // m * m


def _itemsize(dt):
    return np.dtype(dt).itemsize


def _patch_embed_kernel(p_ref, w_ref, b_ref, o_ref):
    # One full-K MXU matmul per output tile, f32 accumulation, fused bias add,
    # cast on store.
    acc = jnp.dot(p_ref[...], w_ref[...], preferred_element_type=jnp.float32)
    o_ref[...] = (acc + b_ref[...]).astype(o_ref.dtype)


def _vmem_caps():
    """Returns (per-tile working-set budget, scoped-VMEM limit) in bytes."""
    try:
        cap = int(pltpu.get_tpu_info().vmem_capacity_bytes)
    except Exception:
        cap = 64 << 20  # conservative default: v7x per-TC physical VMEM
    budget = min(cap // 2, 48 << 20)          # tile working-set target
    limit = min(2 * budget, cap - (8 << 20))  # explicit scoped limit
    return budget, limit


def patch_embed(x, weight, bias, patch_size, *,
                compute_dtype=jnp.bfloat16, out_dtype=None):
    """
    x:      (B, C, H, W)    float32 (NCHW, like PyTorch)
    weight: (E, C, ph, pw)  float32 (Conv2d weight layout)
    bias:   (E,)            float32
    compute_dtype: MXU input dtype (bf16 default; accumulation is always f32)
    out_dtype:     output dtype (default: x.dtype; bf16 saves HBM on v6e/v7x)
    returns (B, num_patches, E)
    """
    B, C, H, W = x.shape
    E = weight.shape[0]
    ph, pw = patch_size
    Hp, Wp = H // ph, W // pw
    num_patches = Hp * Wp

    M = B * num_patches
    K = C * ph * pw
    if out_dtype is None:
        out_dtype = x.dtype
    cd = _itemsize(compute_dtype)
    od = _itemsize(out_dtype)

    # --- glue: extract non-overlapping patches, row-major over (Hp, Wp) ---
    patches = (
        x.astype(compute_dtype)
        .reshape(B, C, Hp, ph, Wp, pw)
        .transpose(0, 2, 4, 1, 3, 5)
        .reshape(M, K)
    )
    # Conv2d weight (E, C, ph, pw) -> (K, E), K flattened in (c, i, j) order.
    w_mat = weight.reshape(E, K).T.astype(compute_dtype)

    # --- padded sizes (zero padding keeps the GEMM exact) ---
    Kp = _round_up(K, 128)
    if Kp > 128 and Kp % 256 != 0:
        Kp = _round_up(K, 256)  # full 2x256^2 MXU passes on v6e/v7x
    Ep = _round_up(E, 128)

    budget, vmem_limit = _vmem_caps()

    # --- N tiling: make the weight resident whenever it fits ---
    w_2buf = 2 * Kp * Ep * cd
    resident = w_2buf <= min(8 << 20, budget // 2)
    if resident:
        tn = Ep
    else:
        tn = next((t for t in (512, 256, 384, 128)
                   if Ep % t == 0 and 2 * Kp * t * cd <= budget // 3), 128)

    # --- M tiling: biggest tile that fits the VMEM budget.  bf16 packs two
    #     rows per sublane, so round to 16 (32 for 8-bit dtypes). ---
    mult = 8 * max(1, 4 // cd)
    m_cap = _round_up(M, mult)

    def tile_vmem(tm_):
        return (2 * tm_ * Kp * cd      # LHS (double-buffered)
                + 2 * Kp * tn * cd     # weight (double-buffered)
                + 2 * tm_ * tn * od    # output (double-buffered)
                + tm_ * tn * 4         # implicit f32 matmul result
                + 2 * tn * 4)          # bias

    candidates = [t for t in (2048, 1024, 512, 256, 128, 64, 32, 16, 8)
                  if t % mult == 0 and t <= m_cap]
    fitting = [t for t in candidates if tile_vmem(t) <= budget] or [mult]
    best = fitting[0]
    # Prefer a tile that divides M (skips padded-M writeback + output slice)
    # unless it is drastically smaller than the best-fitting tile.
    divisors = [t for t in fitting if M % t == 0 and 2 * t >= best]
    tm = divisors[0] if divisors else best
    Mp = _round_up(M, tm)

    if (Mp, Kp) != (M, K):
        patches = jnp.pad(patches, ((0, Mp - M), (0, Kp - K)))
    if (Kp, Ep) != (K, E):
        w_mat = jnp.pad(w_mat, ((0, Kp - K), (0, Ep - E)))
    b_mat = bias.astype(jnp.float32).reshape(1, E)
    if Ep != E:
        b_mat = jnp.pad(b_mat, ((0, 0), (0, Ep - E)))

    m_tiles, e_tiles = Mp // tm, Ep // tn

    if resident:
        # 1-D grid over M; the weight/bias block index is constant, so they
        # are DMA'd once and stay resident in VMEM while the LHS streams.
        # "parallel" lets megacore (v7x: 2 TCs) shard the M tiles.
        grid = (m_tiles,)
        in_specs = [
            pl.BlockSpec((tm, Kp), lambda i: (i, 0)),
            pl.BlockSpec((Kp, Ep), lambda i: (0, 0)),
            pl.BlockSpec((1, Ep), lambda i: (0, 0)),
        ]
        out_specs = pl.BlockSpec((tm, Ep), lambda i: (i, 0))
        semantics = ("parallel",)
        lhs_reads, w_reads = 1, 1
    else:
        # 2-D grid: the operand indexed by the INNER (fast) grid axis is
        # re-streamed from HBM (outer-extent) times — order axes by traffic.
        w_restream = m_tiles * Kp * Ep * cd   # E inner -> weight re-read
        l_restream = e_tiles * Mp * Kp * cd   # M inner -> LHS re-read
        if w_restream <= l_restream:
            grid = (m_tiles, e_tiles)         # E is the inner axis
            in_specs = [
                pl.BlockSpec((tm, Kp), lambda i, j: (i, 0)),
                pl.BlockSpec((Kp, tn), lambda i, j: (0, j)),
                pl.BlockSpec((1, tn), lambda i, j: (0, j)),
            ]
            out_specs = pl.BlockSpec((tm, tn), lambda i, j: (i, j))
            lhs_reads, w_reads = 1, m_tiles
        else:
            grid = (e_tiles, m_tiles)         # M is the inner axis
            in_specs = [
                pl.BlockSpec((tm, Kp), lambda j, i: (i, 0)),
                pl.BlockSpec((Kp, tn), lambda j, i: (0, j)),
                pl.BlockSpec((1, tn), lambda j, i: (0, j)),
            ]
            out_specs = pl.BlockSpec((tm, tn), lambda j, i: (i, j))
            lhs_reads, w_reads = e_tiles, 1
        semantics = ("parallel", "parallel")

    cost = pl.CostEstimate(
        flops=2 * Mp * Kp * Ep,
        transcendentals=0,
        bytes_accessed=(lhs_reads * Mp * Kp * cd
                        + w_reads * Kp * Ep * cd
                        + Mp * Ep * od + Ep * 4),
    )

    out = pl.pallas_call(
        _patch_embed_kernel,
        out_shape=jax.ShapeDtypeStruct((Mp, Ep), out_dtype),
        grid_spec=pltpu.PrefetchScalarGridSpec(
            num_scalar_prefetch=0,
            grid=grid,
            in_specs=in_specs,
            out_specs=out_specs,
        ),
        compiler_params=pltpu.CompilerParams(
            dimension_semantics=semantics,
            vmem_limit_bytes=vmem_limit,
        ),
        cost_estimate=cost,
    )(patches, w_mat, b_mat)

    if Mp == M and Ep == E:
        return out.reshape(B, num_patches, E)
    return out[:M, :E].reshape(B, num_patches, E)


def _reference(x, weight, bias, patch_size):
    B, C, H, W = x.shape
    E = weight.shape[0]
    ph, pw = patch_size
    Hp, Wp = H // ph, W // pw
    return (
        x.reshape(B, C, Hp, ph, Wp, pw)
        .transpose(0, 2, 4, 1, 3, 5)
        .reshape(B * Hp * Wp, C * ph * pw)
        @ weight.reshape(E, -1).T
        + bias
    ).reshape(B, Hp * Wp, E)


if __name__ == "__main__":
    key = jax.random.PRNGKey(0)

    def make_case(key, B, C, H, W, patch, E):
        kx, kw, kb = jax.random.split(key, 3)
        x = jax.random.normal(kx, (B, C, H, W), dtype=jnp.float32)
        w = jax.random.normal(kw, (E, C, patch[0], patch[1]), dtype=jnp.float32) * 0.02
        b = jax.random.normal(kb, (E,), dtype=jnp.float32) * 0.02
        return x, w, b, patch

    k1, k2, k3 = jax.random.split(key, 3)

    # Case 1: small config (E padded 32->128); exact f32 path, tight tolerance.
    x, w, b, patch = make_case(k1, 2, 4, 16, 16, (8, 8), 32)
    ref = _reference(x, w, b, patch)
    out = jax.block_until_ready(
        patch_embed(x, w, b, patch, compute_dtype=jnp.float32))
    assert out.shape == ref.shape, (out.shape, ref.shape)
    assert jnp.allclose(out, ref, atol=1e-4, rtol=1e-4)

    # Case 1b: default bf16 MXU inputs (fast path on all generations).
    out_bf = jax.block_until_ready(patch_embed(x, w, b, patch))
    assert jnp.allclose(out_bf, ref, atol=2e-2, rtol=2e-2)

    # Case 2: non-128 K (C=3 -> K=192 -> Kp=256) and non-128 E.
    x2, w2, b2, patch2 = make_case(k2, 2, 3, 16, 16, (8, 8), 48)
    ref2 = _reference(x2, w2, b2, patch2)
    out2 = jax.block_until_ready(
        patch_embed(x2, w2, b2, patch2, compute_dtype=jnp.float32))
    assert out2.shape == ref2.shape, (out2.shape, ref2.shape)
    assert jnp.allclose(out2, ref2, atol=1e-4, rtol=1e-4)

    # Case 3: module-default-like config (img 64, patch 8, C=3, E=512):
    # exercises the resident-weight 1-D grid with zero output padding.
    x3, w3, b3, patch3 = make_case(k3, 2, 3, 64, 64, (8, 8), 512)
    ref3 = _reference(x3, w3, b3, patch3)
    out3 = jax.block_until_ready(
        patch_embed(x3, w3, b3, patch3, compute_dtype=jnp.float32))
    assert out3.shape == ref3.shape, (out3.shape, ref3.shape)
    assert jnp.allclose(out3, ref3, atol=1e-3, rtol=1e-3)

    # Case 3b: bf16 compute + bf16 output (mem-bound v6e/v7x path).
    out3b = jax.block_until_ready(
        patch_embed(x3, w3, b3, patch3, out_dtype=jnp.bfloat16))
    assert out3b.dtype == jnp.bfloat16
    assert jnp.allclose(out3b.astype(jnp.float32), ref3, atol=3e-2, rtol=3e-2)

    print("KERNEL_OK")
</pallas_src>

<mosaic_0001>
module attributes {stable_mosaic.version = 11 : i64} {
  func.func @_patch_embed_kernel(%arg0: i32, %arg1: memref<8x256xf32, #tpu.memory_space<vmem>>, %arg2: memref<256x128xf32, #tpu.memory_space<vmem>>, %arg3: memref<1x128xf32, #tpu.memory_space<vmem>>, %arg4: memref<8x128xf32, #tpu.memory_space<vmem>>) attributes {dimension_semantics = [#tpu.dimension_semantics<parallel>], iteration_bounds = array<i64: 1>, scalar_prefetch = 0 : i64, scratch_operands = 0 : i64, tpu.core_type = #tpu.core_type<tc>, window_params = [{transform_indices = @transform_0, window_bounds = array<i64: 8, 256>}, {pipeline_mode = #tpu.pipeline_mode<synchronous>, transform_indices = @transform_1, window_bounds = array<i64: 256, 128>}, {pipeline_mode = #tpu.pipeline_mode<synchronous>, transform_indices = @transform_2, window_bounds = array<i64: 1, 128>}, {transform_indices = @transform_3, window_bounds = array<i64: 8, 128>}]} {
    %c0 = arith.constant 0 : index
    %c0_0 = arith.constant 0 : index
    %0 = vector.load %arg1[%c0, %c0_0] : memref<8x256xf32, #tpu.memory_space<vmem>>, vector<8x256xf32>
    %c0_1 = arith.constant 0 : index
    %c0_2 = arith.constant 0 : index
    %1 = vector.load %arg2[%c0_1, %c0_2] : memref<256x128xf32, #tpu.memory_space<vmem>>, vector<256x128xf32>
    %cst = arith.constant dense<0.000000e+00> : vector<8x128xf32>
    %2 = tpu.matmul %0, %1, %cst {dimension_numbers = #tpu.dot_dimension_numbers<[1], [0], [0], [1], [0, 0, 1, 1], [], []>} : vector<8x256xf32>, vector<256x128xf32>, vector<8x128xf32> -> vector<8x128xf32>
    %c0_3 = arith.constant 0 : index
    %c0_4 = arith.constant 0 : index
    %3 = vector.load %arg3[%c0_3, %c0_4] : memref<1x128xf32, #tpu.memory_space<vmem>>, vector<1x128xf32>
    %4 = vector.broadcast %3 : vector<1x128xf32> to vector<8x128xf32>
    %5 = arith.addf %2, %4 : vector<8x128xf32>
    %c0_5 = arith.constant 0 : index
    %c0_6 = arith.constant 0 : index
    %6 = vector.load %arg4[%c0_5, %c0_6] : memref<8x128xf32, #tpu.memory_space<vmem>>, vector<8x128xf32>
    tpu.vector_store %arg4[%c0_5, %c0_6], %5 {strides = array<i32>} : memref<8x128xf32, #tpu.memory_space<vmem>>, vector<8x128xf32>,
    return
  }
  func.func @transform_0(%arg0: i32) -> (i32, i32) {
    %c0_i32 = arith.constant 0 : i32
    %c0_i32_0 = arith.constant 0 : i32
    return %arg0, %c0_i32 : i32, i32
  }
  func.func @transform_1(%arg0: i32) -> (i32, i32) {
    %c0_i32 = arith.constant 0 : i32
    %c0_i32_0 = arith.constant 0 : i32
    %c0_i32_1 = arith.constant 0 : i32
    return %c0_i32, %c0_i32_0 : i32, i32
  }
  func.func @transform_2(%arg0: i32) -> (i32, i32) {
    %c0_i32 = arith.constant 0 : i32
    %c0_i32_0 = arith.constant 0 : i32
    %c0_i32_1 = arith.constant 0 : i32
    return %c0_i32, %c0_i32_0 : i32, i32
  }
  func.func @transform_3(%arg0: i32) -> (i32, i32) {
    %c0_i32 = arith.constant 0 : i32
    %c0_i32_0 = arith.constant 0 : i32
    return %arg0, %c0_i32 : i32, i32
  }
}

</mosaic_0001>

<llo_original>
// kernel: tpu_custom_call.1
$region0: #{tpu_custom_call.1}
  #allocation0 [shape = 'u32[]', space=smem, size = 0x4, offset = 0x4, fixed_abs, tag = 'smem constant byte address 0x4 - core index']
  #allocation1 [shape = 'u32[144,128]{1,0:T(1,128)}', space=vmem, size = 0x12000, scoped, tag = 'internal scratch']
  %s0 = inlined_call_operand.hbm [shape: f32[8,256], index: 0, kind: input, shape index: {}]
  %s1 = inlined_call_operand.hbm [shape: f32[256,128], index: 1, kind: input, shape index: {}]
  %s2 = inlined_call_operand.vmem [shape: f32[1,128], index: 2, kind: input, shape index: {}]
  %s3 = inlined_call_operand.hbm [shape: f32[8,128], index: 3, kind: output, shape index: {}]
  %s4 = sld [smem:[#allocation0]]
  $region30: #{tpu_custom_call.1} parent=0
    _
  %s6 = ssub.s32 1, %s4
  %s7 = scalar_select 0, %s6, %s4
  $region1: #{tpu_custom_call.1} parent=0
    #allocation2 [shape = 'u8[8192]{0}', space=vmem, size = 0x2000, scoped, tag = 'input window, operand 0, single buffered']
    #allocation3 [shape = 's32[1]{0}', space=sflag, size = 0x4, scoped, tag = 'scoped memory for tpu_custom_call.1']
    #allocation4 [shape = 's32[1]{0}', space=sflag, size = 0x4, scoped, tag = 'scoped memory for tpu_custom_call.1']
    #allocation5 [shape = 'u8[131072]{0}', space=vmem, size = 0x20000, scoped, tag = 'input window, operand 1, single buffered']
    #allocation6 [shape = 's32[1]{0}', space=sflag, size = 0x4, scoped, tag = 'scoped memory for tpu_custom_call.1']
    #allocation7 [shape = 'u8[4096]{0}', space=vmem, size = 0x1000, scoped, tag = 'output window, operand 0, single buffered']
    %8 = vsyncpa [#allocation3], 0
    %9 = vsyncpa [#allocation6], 0
    %10 = vsyncpa [#allocation4], 0
    // Predicated region
    $region2: #{tpu_custom_call.1} parent=1 // pred_check
      _
    $region3: #{tpu_custom_call.1} parent=1 // pred_check_branch
      %12 = sbr.rel (0) target = $region5
    $region4: #{tpu_custom_call.1} parent=1 // pred_region
      %s14 = ssub.s32 256, 256
      %15 = vsyncadd [#allocation3], %s14
      %s17 = sshll.u32 [#allocation2], 4
      %s18 = int_to_ptr.vmem [resolvable:$true] %s17
      %20 = dma.hbm_to_vmem [thread:$0]  %s0, 256, %s18, [#allocation3]
    $region5: #{tpu_custom_call.1} parent=1 // pred_fallthru
      _
    // Predicated region
    $region6: #{tpu_custom_call.1} parent=1 // pred_check
      _
    $region7: #{tpu_custom_call.1} parent=1 // pred_check_branch
      %22 = sbr.rel (0) target = $region9
    $region8: #{tpu_custom_call.1} parent=1 // pred_region
      %s24 = ssub.s32 4096, 4096
      %25 = vsyncadd [#allocation6], %s24
      %s26 = sshll.u32 [#allocation5], 4
      %s27 = int_to_ptr.vmem [resolvable:$true] %s26
      %32 = dma.hbm_to_vmem [thread:$0]  %s1, 4096, %s27, [#allocation6], 128, 128, 8
    $region9: #{tpu_custom_call.1} parent=1 // pred_fallthru
      _
    // Predicated region
    $region10: #{tpu_custom_call.1} parent=1 // pred_check
      _
    $region11: #{tpu_custom_call.1} parent=1 // pred_check_branch
      %34 = sbr.rel (0) target = $region13
    $region12: #{tpu_custom_call.1} parent=1 // pred_region
      _
    $region13: #{tpu_custom_call.1} parent=1 // pred_fallthru
      _
    // Predicated region
    $region14: #{tpu_custom_call.1} parent=1 // pred_check
      _
    $region15: #{tpu_custom_call.1} parent=1 // pred_check_branch
      %36 = sbr.rel (0) target = $region17
    $region16: #{tpu_custom_call.1} parent=1 // pred_region
      %37 = dma.done [#allocation3], 256
    $region17: #{tpu_custom_call.1} parent=1 // pred_fallthru
      _
    // Predicated region
    $region18: #{tpu_custom_call.1} parent=1 // pred_check
      _
    $region19: #{tpu_custom_call.1} parent=1 // pred_check_branch
      %39 = sbr.rel (0) target = $region21
    $region20: #{tpu_custom_call.1} parent=1 // pred_region
      %40 = dma.done [#allocation6], 4096
    $region21: #{tpu_custom_call.1} parent=1 // pred_fallthru
      _
    %v41 = vld [vmem:[#allocation2] sm:$0xff]
    %v42 = vld [vmem:[#allocation2 + $0x8] sm:$0xff]
    %v43 = vld [vmem:[#allocation5] sm:$0xff]
    %v44 = vld [vmem:[#allocation5 + $0x8] sm:$0xff]
    %v45 = vld [vmem:[#allocation5 + $0x10] sm:$0xff]
    %v46 = vld [vmem:[#allocation5 + $0x18] sm:$0xff]
    %v47 = vld [vmem:[#allocation5 + $0x20] sm:$0xff]
    %v48 = vld [vmem:[#allocation5 + $0x28] sm:$0xff]
    %v49 = vld [vmem:[#allocation5 + $0x30] sm:$0xff]
    %v50 = vld [vmem:[#allocation5 + $0x38] sm:$0xff]
    %v51 = vld [vmem:[#allocation5 + $0x40] sm:$0xff]
    %v52 = vld [vmem:[#allocation5 + $0x48] sm:$0xff]
    %v53 = vld [vmem:[#allocation5 + $0x50] sm:$0xff]
    %v54 = vld [vmem:[#allocation5 + $0x58] sm:$0xff]
    %v55 = vld [vmem:[#allocation5 + $0x60] sm:$0xff]
    %v56 = vld [vmem:[#allocation5 + $0x68] sm:$0xff]
    %v57 = vld [vmem:[#allocation5 + $0x70] sm:$0xff]
    %v58 = vld [vmem:[#allocation5 + $0x78] sm:$0xff]
    %v59 = vld [vmem:[#allocation5 + $0x80] sm:$0xff]
    %v60 = vld [vmem:[#allocation5 + $0x88] sm:$0xff]
    %v61 = vld [vmem:[#allocation5 + $0x90] sm:$0xff]
    %v62 = vld [vmem:[#allocation5 + $0x98] sm:$0xff]
    %v63 = vld [vmem:[#allocation5 + $0xa0] sm:$0xff]
    %v64 = vld [vmem:[#allocation5 + $0xa8] sm:$0xff]
    %v65 = vld [vmem:[#allocation5 + $0xb0] sm:$0xff]
    %v66 = vld [vmem:[#allocation5 + $0xb8] sm:$0xff]
    %v67 = vld [vmem:[#allocation5 + $0xc0] sm:$0xff]
    %v68 = vld [vmem:[#allocation5 + $0xc8] sm:$0xff]
    %v69 = vld [vmem:[#allocation5 + $0xd0] sm:$0xff]
    %v70 = vld [vmem:[#allocation5 + $0xd8] sm:$0xff]
    %v71 = vld [vmem:[#allocation5 + $0xe0] sm:$0xff]
    %v72 = vld [vmem:[#allocation5 + $0xe8] sm:$0xff]
    %v73 = vld [vmem:[#allocation5 + $0xf0] sm:$0xff]
    %v74 = vld [vmem:[#allocation5 + $0xf8] sm:$0xff]
    %v75 = vld [vmem:[%s2] sm:$0x1]
    %v77 = vlaneseq
    %v78 = vshrl.u32 %v77, 7
    %v79 = vsub.s32 0, %v78
    %v80 = vrot.slane %v75, %v79
    %82 = vmatprep.subr.mxu0 0.0
    %83 = vmatpush1.msra.mxu0 %v58
    %84 = vmatprep.subr.mxu0 0.0
    %85 = vmatpush1.msra.mxu0 %v57
    %86 = vmatprep.subr.mxu0 0.0
    %87 = vmatpush1.msra.mxu0 %v56
    %88 = vmatprep.subr.mxu0 0.0
    %89 = vmatpush1.msra.mxu0 %v55
    %90 = vmatprep.subr.mxu0 0.0
    %91 = vmatpush1.msra.mxu0 %v54
    %92 = vmatprep.subr.mxu0 0.0
    %93 = vmatpush1.msra.mxu0 %v53
    %94 = vmatprep.subr.mxu0 0.0
    %95 = vmatpush1.msra.mxu0 %v52
    %96 = vmatprep.subr.mxu0 0.0
    %97 = vmatpush1.msra.mxu0 %v51
    %98 = vmatprep.subr.mxu0 0.0
    %99 = vmatpush1.msra.mxu0 %v50
    %100 = vmatprep.subr.mxu0 0.0
    %101 = vmatpush1.msra.mxu0 %v49
    %102 = vmatprep.subr.mxu0 0.0
    %103 = vmatpush1.msra.mxu0 %v48
    %104 = vmatprep.subr.mxu0 0.0
    %105 = vmatpush1.msra.mxu0 %v47
    %106 = vmatprep.subr.mxu0 0.0
    %107 = vmatpush1.msra.mxu0 %v46
    %108 = vmatprep.subr.mxu0 0.0
    %109 = vmatpush1.msra.mxu0 %v45
    %110 = vmatprep.subr.mxu0 0.0
    %111 = vmatpush1.msra.mxu0 %v44
    %112 = vmatprep.subr.mxu0 0.0
    %113 = vmatpush1.msra.mxu0 %v43
    %114 = vmatprep.subr.mxu0 0.0
    %115 = vmatpush2.msra.mxu0 %v74
    %116 = vmatprep.subr.mxu0 0.0
    %117 = vmatpush2.msra.mxu0 %v73
    %118 = vmatprep.subr.mxu0 0.0
    %119 = vmatpush2.msra.mxu0 %v72
    %120 = vmatprep.subr.mxu0 0.0
    %121 = vmatpush2.msra.mxu0 %v71
    %122 = vmatprep.subr.mxu0 0.0
    %123 = vmatpush2.msra.mxu0 %v70
    %124 = vmatprep.subr.mxu0 0.0
    %125 = vmatpush2.msra.mxu0 %v69
    %126 = vmatprep.subr.mxu0 0.0
    %127 = vmatpush2.msra.mxu0 %v68
    %128 = vmatprep.subr.mxu0 0.0
    %129 = vmatpush2.msra.mxu0 %v67
    %130 = vmatprep.subr.mxu0 0.0
    %131 = vmatpush2.msra.mxu0 %v66
    %132 = vmatprep.subr.mxu0 0.0
    %133 = vmatpush2.msra.mxu0 %v65
    %134 = vmatprep.subr.mxu0 0.0
    %135 = vmatpush2.msra.mxu0 %v64
    %136 = vmatprep.subr.mxu0 0.0
    %137 = vmatpush2.msra.mxu0 %v63
    %138 = vmatprep.subr.mxu0 0.0
    %139 = vmatpush2.msra.mxu0 %v62
    %140 = vmatprep.subr.mxu0 0.0
    %141 = vmatpush2.msra.mxu0 %v61
    %142 = vmatprep.subr.mxu0 0.0
    %143 = vmatpush2.msra.mxu0 %v60
    %144 = vmatprep.subr.mxu0 0.0
    %145 = vmatpush2.msra.mxu0 %v59
    %146 = vmatprep.mubr.f32.mxu0 %v42
    %147 = vmatmul.mubr.f32.gmra.mxu0 %v41
    %v148 = vpop.f32.mrf.mxu0
    %v149 = vadd.f32 %v80, %v148
    %v150 = vpop.f32.mrf.mxu0
    %151 = vdwg.mxu0
    %152 = vst [vmem:[#allocation7] sm:$0xff] %v149
    // Predicated region
    $region22: #{tpu_custom_call.1} parent=1 // pred_check
      _
    $region23: #{tpu_custom_call.1} parent=1 // pred_check_branch
      %154 = sbr.rel (0) target = $region25
    $region24: #{tpu_custom_call.1} parent=1 // pred_region
      %s156 = ssub.s32 128, 128
      %157 = vsyncadd [#allocation4], %s156
      %s159 = sshll.u32 [#allocation7], 4
      %s160 = int_to_ptr.vmem [resolvable:$true] %s159
      %162 = dma.vmem_to_hbm [thread:$0]  %s160, 128, %s3, [#allocation4]
    $region25: #{tpu_custom_call.1} parent=1 // pred_fallthru
      _
    // Predicated region
    $region26: #{tpu_custom_call.1} parent=1 // pred_check
      _
    $region27: #{tpu_custom_call.1} parent=1 // pred_check_branch
      %164 = sbr.rel (0) target = $region29
    $region28: #{tpu_custom_call.1} parent=1 // pred_region
      %165 = dma.done [#allocation4], 128
    $region29: #{tpu_custom_call.1} parent=1 // pred_fallthru
      _
    %166 = vsyncpa [#allocation3], 1
    %167 = vsyncpa [#allocation6], 1
    %168 = vsyncpa [#allocation4], 1

</llo_original>
